<compile_context>
chip_gen: v6e
topology: v6e:2x2x1
jax: 0.10.0
libtpu: 0.0.40
codegen_flags: <defaults>
</compile_context>

<pallas_src>
import jax
import jax.numpy as jnp
from jax.experimental import pallas as pl
from jax.experimental.pallas import tpu as pltpu


S = 8             # samples packed per reshaped row (row width = 8 features * S = 64 lanes)
MAX_TILE = 32768  # max samples per grid step
MIN_TILE = 512    # min samples per grid step (multiple of 512)


def _round_up(n, m):
    return ((n + m - 1) // m) * m


def diabetes_mlp_kernel(x_ref, w1_ref, b1_ref, w2_ref, b2_ref, w3_ref, b3_ref, o_ref):
    # x_ref: (rt, 8*S) -- each row holds S consecutive samples (8 features each).
    x = x_ref[...]

    # fc1 + ReLU: (rt, 8S) @ (8S, 16S) -> (rt, 16S)   (block-diagonal kron(I_S, W1^T))
    h1 = jnp.dot(x, w1_ref[...], preferred_element_type=jnp.float32) + b1_ref[...]
    h1 = jnp.maximum(h1, 0.0)

    # fc2 + ReLU: (rt, 16S) @ (16S, 8S) -> (rt, 8S)
    h2 = jnp.dot(h1, w2_ref[...], preferred_element_type=jnp.float32) + b2_ref[...]
    h2 = jnp.maximum(h2, 0.0)

    # fc3 + Sigmoid: (rt, 8S) @ (8S, S) -> (rt, S)  (one output lane per packed sample)
    z = jnp.dot(h2, w3_ref[...], preferred_element_type=jnp.float32) + b3_ref[...]
    o_ref[...] = jax.nn.sigmoid(z)


def diabetes_nn_forward(x, params):
    """x: (B, 8) float32 (natural PyTorch layout). Returns (B, 1) float32."""
    B = x.shape[0]
    w1, b1, w2, b2, w3, b3 = (params[k] for k in ("w1", "b1", "w2", "b2", "w3", "b3"))
    f32 = jnp.float32
    eye = jnp.eye(S, dtype=f32)

    # Block-diagonal weights absorb the interleaved-sample layout into the MXU.
    w1_bd = jnp.kron(eye, w1.T.astype(f32))                 # (8S, 16S) = (64, 128)
    w2_bd = jnp.kron(eye, w2.T.astype(f32))                 # (16S, 8S) = (128, 64)
    w3_bd = jnp.kron(eye, w3.T.astype(f32))                 # (8S,  S ) = (64, 8)
    b1_t = jnp.tile(b1.reshape(-1).astype(f32), S)[None, :]  # (1, 16S)
    b2_t = jnp.tile(b2.reshape(-1).astype(f32), S)[None, :]  # (1, 8S)
    b3_t = jnp.tile(b3.reshape(-1).astype(f32), S)[None, :]  # (1, S)

    # Pad only when B is not a multiple of S (tiny copy); otherwise the reshape
    # below is a free metadata-only view of the contiguous row-major input.
    B1 = _round_up(B, S)
    if B1 != B:
        x = jnp.concatenate([x, jnp.zeros((B1 - B, 8), x.dtype)], axis=0)
    R = B1 // S
    x_r = x.astype(f32).reshape(R, 8 * S)                   # (R, 64), free reshape

    # Tile: ~B/4 samples per step (>= 4 tiles on large batches -> both v7x TCs
    # busy), rounded to a multiple of 512, capped at 32768 (working set ~14 MiB).
    tile = int(min(MAX_TILE, max(MIN_TILE, _round_up(max(B1 // 4, 1), MIN_TILE))))
    rt = min(tile // S, _round_up(R, 8))                    # rows per grid step (mult of 8)
    num_tiles = pl.cdiv(R, rt)

    cost = pl.CostEstimate(
        flops=2 * R * (8 * S * 16 * S + 16 * S * 8 * S + 8 * S * S),
        transcendentals=B1,                                  # one sigmoid exp per sample
        bytes_accessed=36 * B1,                              # 32 B in + 4 B out per sample
    )

    const = lambda i: (0, 0)  # weights/biases: same full block every step -> resident in VMEM

    out_r = pl.pallas_call(
        diabetes_mlp_kernel,
        out_shape=jax.ShapeDtypeStruct((R, S), f32),
        grid=(num_tiles,),
        in_specs=[
            pl.BlockSpec((rt, 8 * S), lambda i: (i, 0)),     # x rows (ragged last block OK)
            pl.BlockSpec(w1_bd.shape, const),
            pl.BlockSpec(b1_t.shape, const),
            pl.BlockSpec(w2_bd.shape, const),
            pl.BlockSpec(b2_t.shape, const),
            pl.BlockSpec(w3_bd.shape, const),
            pl.BlockSpec(b3_t.shape, const),
        ],
        out_specs=pl.BlockSpec((rt, S), lambda i: (i, 0)),
        compiler_params=pltpu.CompilerParams(
            dimension_semantics=("parallel",),               # v7x: shard batch tiles over 2 TCs
            vmem_limit_bytes=48 * 1024 * 1024,               # > v5e 16 MiB default, < v7x 64 MiB phys
        ),
        cost_estimate=cost,
    )(x_r, w1_bd, b1_t, w2_bd, b2_t, w3_bd, b3_t)

    # (R, S) -> (B1, 1) is another free contiguous reshape; drop padded samples.
    return out_r.reshape(B1, 1)[:B]


def init_params(key):
    """Deterministic init mimicking PyTorch nn.Linear default (uniform +-1/sqrt(fan_in)).

    Weights stored PyTorch-style (out, in); biases stored as (out,) vectors.
    """
    def linear(k, fan_in, fan_out):
        kw, kb = jax.random.split(k)
        bound = 1.0 / (fan_in ** 0.5)
        w = jax.random.uniform(kw, (fan_out, fan_in), jnp.float32, -bound, bound)
        b = jax.random.uniform(kb, (fan_out,), jnp.float32, -bound, bound)
        return w, b

    k1, k2, k3 = jax.random.split(key, 3)
    w1, b1 = linear(k1, 8, 16)
    w2, b2 = linear(k2, 16, 8)
    w3, b3 = linear(k3, 8, 1)
    return {"w1": w1, "b1": b1, "w2": w2, "b2": b2, "w3": w3, "b3": b3}


def reference_forward(x, p):
    hp = jax.lax.Precision.HIGHEST
    h1 = jnp.maximum(jnp.dot(x, p["w1"].T, precision=hp) + p["b1"], 0.0)
    h2 = jnp.maximum(jnp.dot(h1, p["w2"].T, precision=hp) + p["b2"], 0.0)
    return jax.nn.sigmoid(jnp.dot(h2, p["w3"].T, precision=hp) + p["b3"])


if __name__ == "__main__":
    key = jax.random.PRNGKey(0)
    kp, k1, k2, k3 = jax.random.split(key, 4)
    params = init_params(kp)
    fwd = jax.jit(diabetes_nn_forward)

    # B=8: tiny single ragged block; B=300: non-multiple-of-8 batch (pad path);
    # B=1536: multi-tile grid (3 batch tiles).
    for kx, batch in ((k1, 8), (k2, 300), (k3, 1536)):
        x = jax.random.normal(kx, (batch, 8), dtype=jnp.float32)
        out = jax.block_until_ready(fwd(x, params))
        ref = reference_forward(x, params)
        assert out.shape == (batch, 1), out.shape
        assert bool(jnp.all(jnp.isfinite(out)))
        err = float(jnp.max(jnp.abs(out - ref)))
        assert err < 5e-3, f"batch={batch} max abs err={err}"

    print("KERNEL_OK")
</pallas_src>

<mosaic_0001>
module attributes {stable_mosaic.version = 11 : i64} {
  func.func @diabetes_mlp_kernel(%arg0: i32, %arg1: memref<8x64xf32, #tpu.memory_space<vmem>>, %arg2: memref<64x128xf32, #tpu.memory_space<vmem>>, %arg3: memref<1x128xf32, #tpu.memory_space<vmem>>, %arg4: memref<128x64xf32, #tpu.memory_space<vmem>>, %arg5: memref<1x64xf32, #tpu.memory_space<vmem>>, %arg6: memref<64x8xf32, #tpu.memory_space<vmem>>, %arg7: memref<1x8xf32, #tpu.memory_space<vmem>>, %arg8: memref<8x8xf32, #tpu.memory_space<vmem>>) attributes {dimension_semantics = [#tpu.dimension_semantics<parallel>], iteration_bounds = array<i64: 1>, scalar_prefetch = 0 : i64, scratch_operands = 0 : i64, tpu.core_type = #tpu.core_type<tc>, window_params = [{transform_indices = @transform_0, window_bounds = array<i64: 8, 64>}, {pipeline_mode = #tpu.pipeline_mode<synchronous>, transform_indices = @transform_1, window_bounds = array<i64: 64, 128>}, {pipeline_mode = #tpu.pipeline_mode<synchronous>, transform_indices = @transform_2, window_bounds = array<i64: 1, 128>}, {pipeline_mode = #tpu.pipeline_mode<synchronous>, transform_indices = @transform_3, window_bounds = array<i64: 128, 64>}, {pipeline_mode = #tpu.pipeline_mode<synchronous>, transform_indices = @transform_4, window_bounds = array<i64: 1, 64>}, {pipeline_mode = #tpu.pipeline_mode<synchronous>, transform_indices = @transform_5, window_bounds = array<i64: 64, 8>}, {pipeline_mode = #tpu.pipeline_mode<synchronous>, transform_indices = @transform_6, window_bounds = array<i64: 1, 8>}, {transform_indices = @transform_7, window_bounds = array<i64: 8, 8>}]} {
    %c0 = arith.constant 0 : index
    %c0_0 = arith.constant 0 : index
    %0 = vector.load %arg1[%c0, %c0_0] : memref<8x64xf32, #tpu.memory_space<vmem>>, vector<8x64xf32>
    %c0_1 = arith.constant 0 : index
    %c0_2 = arith.constant 0 : index
    %1 = vector.load %arg2[%c0_1, %c0_2] : memref<64x128xf32, #tpu.memory_space<vmem>>, vector<64x128xf32>
    %cst = arith.constant dense<0.000000e+00> : vector<8x128xf32>
    %2 = tpu.matmul %0, %1, %cst {dimension_numbers = #tpu.dot_dimension_numbers<[1], [0], [0], [1], [0, 0, 1, 1], [], []>} : vector<8x64xf32>, vector<64x128xf32>, vector<8x128xf32> -> vector<8x128xf32>
    %c0_3 = arith.constant 0 : index
    %c0_4 = arith.constant 0 : index
    %3 = vector.load %arg3[%c0_3, %c0_4] : memref<1x128xf32, #tpu.memory_space<vmem>>, vector<1x128xf32>
    %4 = vector.broadcast %3 : vector<1x128xf32> to vector<8x128xf32>
    %5 = arith.addf %2, %4 : vector<8x128xf32>
    %cst_5 = arith.constant 0.000000e+00 : f32
    %6 = vector.broadcast %cst_5 : f32 to vector<8x128xf32>
    %7 = arith.maximumf %5, %6 : vector<8x128xf32>
    %c0_6 = arith.constant 0 : index
    %c0_7 = arith.constant 0 : index
    %8 = vector.load %arg4[%c0_6, %c0_7] : memref<128x64xf32, #tpu.memory_space<vmem>>, vector<128x64xf32>
    %cst_8 = arith.constant dense<0.000000e+00> : vector<8x64xf32>
    %9 = tpu.matmul %7, %8, %cst_8 {dimension_numbers = #tpu.dot_dimension_numbers<[1], [0], [0], [1], [0, 0, 1, 1], [], []>} : vector<8x128xf32>, vector<128x64xf32>, vector<8x64xf32> -> vector<8x64xf32>
    %c0_9 = arith.constant 0 : index
    %c0_10 = arith.constant 0 : index
    %10 = vector.load %arg5[%c0_9, %c0_10] : memref<1x64xf32, #tpu.memory_space<vmem>>, vector<1x64xf32>
    %11 = vector.broadcast %10 : vector<1x64xf32> to vector<8x64xf32>
    %12 = arith.addf %9, %11 : vector<8x64xf32>
    %cst_11 = arith.constant 0.000000e+00 : f32
    %13 = vector.broadcast %cst_11 : f32 to vector<8x64xf32>
    %14 = arith.maximumf %12, %13 : vector<8x64xf32>
    %c0_12 = arith.constant 0 : index
    %c0_13 = arith.constant 0 : index
    %15 = vector.load %arg6[%c0_12, %c0_13] : memref<64x8xf32, #tpu.memory_space<vmem>>, vector<64x8xf32>
    %cst_14 = arith.constant dense<0.000000e+00> : vector<8x8xf32>
    %16 = tpu.matmul %14, %15, %cst_14 {dimension_numbers = #tpu.dot_dimension_numbers<[1], [0], [0], [1], [0, 0, 1, 1], [], []>} : vector<8x64xf32>, vector<64x8xf32>, vector<8x8xf32> -> vector<8x8xf32>
    %c0_15 = arith.constant 0 : index
    %c0_16 = arith.constant 0 : index
    %17 = vector.load %arg7[%c0_15, %c0_16] : memref<1x8xf32, #tpu.memory_space<vmem>>, vector<1x8xf32>
    %18 = vector.broadcast %17 : vector<1x8xf32> to vector<8x8xf32>
    %19 = arith.addf %16, %18 : vector<8x8xf32>
    %20 = arith.negf %19 : vector<8x8xf32>
    %21 = math.exp %20 : vector<8x8xf32>
    %cst_17 = arith.constant 1.000000e+00 : f32
    %22 = vector.broadcast %cst_17 : f32 to vector<8x8xf32>
    %23 = arith.addf %22, %21 : vector<8x8xf32>
    %24 = arith.divf %22, %23 : vector<8x8xf32>
    %c0_18 = arith.constant 0 : index
    %c0_19 = arith.constant 0 : index
    %25 = vector.load %arg8[%c0_18, %c0_19] : memref<8x8xf32, #tpu.memory_space<vmem>>, vector<8x8xf32>
    tpu.vector_store %arg8[%c0_18, %c0_19], %24 {strides = array<i32>} : memref<8x8xf32, #tpu.memory_space<vmem>>, vector<8x8xf32>,
    return
  }
  func.func @transform_0(%arg0: i32) -> (i32, i32) {
    %c0_i32 = arith.constant 0 : i32
    %c0_i32_0 = arith.constant 0 : i32
    return %arg0, %c0_i32 : i32, i32
  }
  func.func @transform_1(%arg0: i32) -> (i32, i32) {
    %c0_i32 = arith.constant 0 : i32
    %c0_i32_0 = arith.constant 0 : i32
    %c0_i32_1 = arith.constant 0 : i32
    return %c0_i32, %c0_i32_0 : i32, i32
  }
  func.func @transform_2(%arg0: i32) -> (i32, i32) {
    %c0_i32 = arith.constant 0 : i32
    %c0_i32_0 = arith.constant 0 : i32
    %c0_i32_1 = arith.constant 0 : i32
    return %c0_i32, %c0_i32_0 : i32, i32
  }
  func.func @transform_3(%arg0: i32) -> (i32, i32) {
    %c0_i32 = arith.constant 0 : i32
    %c0_i32_0 = arith.constant 0 : i32
    %c0_i32_1 = arith.constant 0 : i32
    return %c0_i32, %c0_i32_0 : i32, i32
  }
  func.func @transform_4(%arg0: i32) -> (i32, i32) {
    %c0_i32 = arith.constant 0 : i32
    %c0_i32_0 = arith.constant 0 : i32
    %c0_i32_1 = arith.constant 0 : i32
    return %c0_i32, %c0_i32_0 : i32, i32
  }
  func.func @transform_5(%arg0: i32) -> (i32, i32) {
    %c0_i32 = arith.constant 0 : i32
    %c0_i32_0 = arith.constant 0 : i32
    %c0_i32_1 = arith.constant 0 : i32
    return %c0_i32, %c0_i32_0 : i32, i32
  }
  func.func @transform_6(%arg0: i32) -> (i32, i32) {
    %c0_i32 = arith.constant 0 : i32
    %c0_i32_0 = arith.constant 0 : i32
    %c0_i32_1 = arith.constant 0 : i32
    return %c0_i32, %c0_i32_0 : i32, i32
  }
  func.func @transform_7(%arg0: i32) -> (i32, i32) {
    %c0_i32 = arith.constant 0 : i32
    %c0_i32_0 = arith.constant 0 : i32
    return %arg0, %c0_i32 : i32, i32
  }
}

</mosaic_0001>

<llo_original>
// kernel: tile.19
$region0: #{tile.19}
  %s0 = inlined_call_operand.vmem [shape: f32[8,16], index: 0, kind: input, shape index: {}]
  %s1 = inlined_call_operand.vmem [shape: f32[1,128], index: 1, kind: output, shape index: {}]
  $region1: #{tile.19} parent=0
    #allocation0 [shape = 'u8[4096]{0}', space=vmem, size = 0x1000, scoped, tag = 'scoped mem for output reshape']
    %v2 = vld [vmem:[%s0] sm:$0x1]
    %vm3 = vcmask 130048
    %4 = vst.msk [vmem:[#allocation0] sm:$0x1] %vm3, %v2
    %s5 = scalar_lea.vmem %s0, 7
    %v6 = vld [vmem:[%s5] sm:$0x1]
    %7 = vrot.lane.b32.xlu0 %v6, 112
    %v8 = vpop.permute.xlu0 %7
    %vm9 = vcmask 1048448
    %10 = vst.msk [vmem:[#allocation0] sm:$0x1] %vm9, %v8
    %s11 = scalar_lea.vmem %s0, 6
    %v12 = vld [vmem:[%s11] sm:$0x1]
    %13 = vrot.lane.b32.xlu0 %v12, 96
    %v14 = vpop.permute.xlu0 %13
    %vm15 = vcmask 917248
    %16 = vst.msk [vmem:[#allocation0] sm:$0x1] %vm15, %v14
    %s17 = scalar_lea.vmem %s0, 5
    %v18 = vld [vmem:[%s17] sm:$0x1]
    %19 = vrot.lane.b32.xlu0 %v18, 80
    %v20 = vpop.permute.xlu0 %19
    %vm21 = vcmask 786048
    %22 = vst.msk [vmem:[#allocation0] sm:$0x1] %vm21, %v20
    %s23 = scalar_lea.vmem %s0, 4
    %v24 = vld [vmem:[%s23] sm:$0x1]
    %25 = vrot.lane.b32.xlu0 %v24, 64
    %v26 = vpop.permute.xlu0 %25
    %vm27 = vcmask 654848
    %28 = vst.msk [vmem:[#allocation0] sm:$0x1] %vm27, %v26
    %s29 = scalar_lea.vmem %s0, 3
    %v30 = vld [vmem:[%s29] sm:$0x1]
    %31 = vrot.lane.b32.xlu0 %v30, 48
    %v32 = vpop.permute.xlu0 %31
    %vm33 = vcmask 523648
    %34 = vst.msk [vmem:[#allocation0] sm:$0x1] %vm33, %v32
    %s35 = scalar_lea.vmem %s0, 2
    %v36 = vld [vmem:[%s35] sm:$0x1]
    %37 = vrot.lane.b32.xlu0 %v36, 32
    %v38 = vpop.permute.xlu0 %37
    %vm39 = vcmask 392448
    %40 = vst.msk [vmem:[#allocation0] sm:$0x1] %vm39, %v38
    %s41 = scalar_lea.vmem %s0, 1
    %v42 = vld [vmem:[%s41] sm:$0x1]
    %43 = vrot.lane.b32.xlu0 %v42, 16
    %v44 = vpop.permute.xlu0 %43
    %vm45 = vcmask 261248
    %46 = vst.msk [vmem:[#allocation0] sm:$0x1] %vm45, %v44
    %s48 = sshll.u32 1, 1
    %s49 = ssub.s32 %s48, 1
    %v51 = vld [vmem:[#allocation0] sm:%s49]
    %s52 = sshll.u32 1, 1
    %s53 = ssub.s32 %s52, 1
    %54 = vst [vmem:[%s1] sm:%s53] %v51

// kernel: tile.18
$region0: #{tile.18}
  #allocation0 [shape = 's32[1]{0}', space=sflag, size = 0x4, scoped, tag = 'scoped memory for tile.18']
  %s0 = inlined_call_operand.vmem [shape: f32[16], index: 0, kind: input, shape index: {}]
  %s1 = inlined_call_operand.vmem [shape: f32[8,16], index: 1, kind: output, shape index: {}]
  // Predicated region
  $region2: #{tile.18} parent=0 // pred_check
    _
  $region3: #{tile.18} parent=0 // pred_check_branch
    %3 = sbr.rel (0) target = $region5
  $region4: #{tile.18} parent=0 // pred_region
    _
  $region5: #{tile.18} parent=0 // pred_fallthru
    _
  %v4 = vld [vmem:[%s0] ss:$0 sm:$0xff]
  %5 = vst [vmem:[%s1] sm:$0xff] %v4

// kernel: tile.23
$region0: #{tile.23}
  #allocation0 [shape = 's32[1]{0}', space=sflag, size = 0x4, scoped, tag = 'scoped memory for tile.23']
  %s0 = inlined_call_operand.vmem [shape: f32[8], index: 0, kind: input, shape index: {}]
  %s1 = inlined_call_operand.vmem [shape: f32[8,8], index: 1, kind: output, shape index: {}]
  // Predicated region
  $region2: #{tile.23} parent=0 // pred_check
    _
  $region3: #{tile.23} parent=0 // pred_check_branch
    %3 = sbr.rel (0) target = $region5
  $region4: #{tile.23} parent=0 // pred_region
    _
  $region5: #{tile.23} parent=0 // pred_fallthru
    _
  %v4 = vld [vmem:[%s0] ss:$0 sm:$0xff]
  %5 = vst [vmem:[%s1] sm:$0xff] %v4

// kernel: diabetes_nn_forward.1
$region0: #{diabetes_nn_forward.1}
  #allocation0 [shape = 'u32[]', space=smem, size = 0x4, offset = 0x4, fixed_abs, tag = 'smem constant byte address 0x4 - core index']
  #allocation1 [shape = 'u32[144,128]{1,0:T(1,128)}', space=vmem, size = 0x12000, scoped, tag = 'internal scratch']
  %s0 = inlined_call_operand.vmem [shape: f32[1,64], index: 0, kind: input, shape index: {}]
  %s1 = inlined_call_operand.vmem [shape: f32[64,128], index: 1, kind: input, shape index: {}]
  %s2 = inlined_call_operand.vmem [shape: f32[1,128], index: 2, kind: input, shape index: {}]
  %s3 = inlined_call_operand.vmem [shape: f32[128,64], index: 3, kind: input, shape index: {}]
  %s4 = inlined_call_operand.vmem [shape: f32[1,64], index: 4, kind: input, shape index: {}]
  %s5 = inlined_call_operand.vmem [shape: f32[64,8], index: 5, kind: input, shape index: {}]
  %s6 = inlined_call_operand.vmem [shape: f32[1,8], index: 6, kind: input, shape index: {}]
  %s7 = inlined_call_operand.hbm [shape: f32[1,8], index: 7, kind: output, shape index: {}]
  %s8 = sld [smem:[#allocation0]]
  $region38: #{diabetes_nn_forward.1} parent=0
    _
  %s10 = ssub.s32 1, %s8
  %s11 = scalar_select 0, %s10, %s8
  $region1: #{diabetes_nn_forward.1} parent=0
    #allocation2 [shape = 'u8[4096]{0}', space=vmem, size = 0x1000, scoped, tag = 'output window, operand 0, single buffered']
    #allocation3 [shape = 's32[1]{0}', space=sflag, size = 0x4, scoped, tag = 'scoped memory for diabetes_nn_forward.1']
    %12 = vsyncpa [#allocation3], 0
    // Predicated region
    $region2: #{diabetes_nn_forward.1} parent=1 // pred_check
      _
    $region3: #{diabetes_nn_forward.1} parent=1 // pred_check_branch
      %14 = sbr.rel (0) target = $region5
    $region4: #{diabetes_nn_forward.1} parent=1 // pred_region
      _
    $region5: #{diabetes_nn_forward.1} parent=1 // pred_fallthru
      _
    // Predicated region
    $region6: #{diabetes_nn_forward.1} parent=1 // pred_check
      _
    $region7: #{diabetes_nn_forward.1} parent=1 // pred_check_branch
      %16 = sbr.rel (0) target = $region9
    $region8: #{diabetes_nn_forward.1} parent=1 // pred_region
      _
    $region9: #{diabetes_nn_forward.1} parent=1 // pred_fallthru
      _
    // Predicated region
    $region10: #{diabetes_nn_forward.1} parent=1 // pred_check
      _
    $region11: #{diabetes_nn_forward.1} parent=1 // pred_check_branch
      %18 = sbr.rel (0) target = $region13
    $region12: #{diabetes_nn_forward.1} parent=1 // pred_region
      _
    $region13: #{diabetes_nn_forward.1} parent=1 // pred_fallthru
      _
    // Predicated region
    $region14: #{diabetes_nn_forward.1} parent=1 // pred_check
      _
    $region15: #{diabetes_nn_forward.1} parent=1 // pred_check_branch
      %20 = sbr.rel (0) target = $region17
    $region16: #{diabetes_nn_forward.1} parent=1 // pred_region
      _
    $region17: #{diabetes_nn_forward.1} parent=1 // pred_fallthru
      _
    // Predicated region
    $region18: #{diabetes_nn_forward.1} parent=1 // pred_check
      _
    $region19: #{diabetes_nn_forward.1} parent=1 // pred_check_branch
      %22 = sbr.rel (0) target = $region21
    $region20: #{diabetes_nn_forward.1} parent=1 // pred_region
      _
    $region21: #{diabetes_nn_forward.1} parent=1 // pred_fallthru
      _
    // Predicated region
    $region22: #{diabetes_nn_forward.1} parent=1 // pred_check
      _
    $region23: #{diabetes_nn_forward.1} parent=1 // pred_check_branch
      %24 = sbr.rel (0) target = $region25
    $region24: #{diabetes_nn_forward.1} parent=1 // pred_region
      _
    $region25: #{diabetes_nn_forward.1} parent=1 // pred_fallthru
      _
    // Predicated region
    $region26: #{diabetes_nn_forward.1} parent=1 // pred_check
      _
    $region27: #{diabetes_nn_forward.1} parent=1 // pred_check_branch
      %26 = sbr.rel (0) target = $region29
    $region28: #{diabetes_nn_forward.1} parent=1 // pred_region
      _
    $region29: #{diabetes_nn_forward.1} parent=1 // pred_fallthru
      _
    %v27 = vld [vmem:[%s0] sm:$0xff]
    %v28 = vld [vmem:[%s1] sm:$0xff]
    %v29 = vld [vmem:[%s1 + $0x8] sm:$0xff]
    %v30 = vld [vmem:[%s1 + $0x10] sm:$0xff]
    %v31 = vld [vmem:[%s1 + $0x18] sm:$0xff]
    %v32 = vld [vmem:[%s1 + $0x20] sm:$0xff]
    %v33 = vld [vmem:[%s1 + $0x28] sm:$0xff]
    %v34 = vld [vmem:[%s1 + $0x30] sm:$0xff]
    %v35 = vld [vmem:[%s1 + $0x38] sm:$0xff]
    %v36 = vld [vmem:[%s2] sm:$0x1]
    %v38 = vlaneseq
    %v39 = vshrl.u32 %v38, 7
    %v40 = vsub.s32 0, %v39
    %v41 = vrot.slane %v36, %v40
    %vm43 = vcmask 523264
    %v45 = vsel %vm43, %v27, 0
    %47 = vmatprep.subr.mxu0 0.0
    %48 = vmatpush1.msra.mxu0 0.0
    %49 = vmatprep.subr.mxu0 0.0
    %50 = vmatpush1.msra.mxu0 0.0
    %51 = vmatprep.subr.mxu0 0.0
    %52 = vmatpush1.msra.mxu0 0.0
    %53 = vmatprep.subr.mxu0 0.0
    %54 = vmatpush1.msra.mxu0 0.0
    %55 = vmatprep.subr.mxu0 0.0
    %56 = vmatpush1.msra.mxu0 0.0
    %57 = vmatprep.subr.mxu0 0.0
    %58 = vmatpush1.msra.mxu0 0.0
    %59 = vmatprep.subr.mxu0 0.0
    %60 = vmatpush1.msra.mxu0 0.0
    %61 = vmatprep.subr.mxu0 0.0
    %62 = vmatpush1.msra.mxu0 0.0
    %63 = vmatprep.subr.mxu0 0.0
    %64 = vmatpush1.msra.mxu0 %v35
    %65 = vmatprep.subr.mxu0 0.0
    %66 = vmatpush1.msra.mxu0 %v34
    %67 = vmatprep.subr.mxu0 0.0
    %68 = vmatpush1.msra.mxu0 %v33
    %69 = vmatprep.subr.mxu0 0.0
    %70 = vmatpush1.msra.mxu0 %v32
    %71 = vmatprep.subr.mxu0 0.0
    %72 = vmatpush1.msra.mxu0 %v31
    %73 = vmatprep.subr.mxu0 0.0
    %74 = vmatpush1.msra.mxu0 %v30
    %75 = vmatprep.subr.mxu0 0.0
    %76 = vmatpush1.msra.mxu0 %v29
    %77 = vmatprep.subr.mxu0 0.0
    %78 = vmatpush1.msra.mxu0 %v28
    %79 = vmatprep.subr.mxu0 0.0
    %80 = vmatpush2.msra.mxu0 0.0
    %81 = vmatprep.subr.mxu0 0.0
    %82 = vmatpush2.msra.mxu0 0.0
    %83 = vmatprep.subr.mxu0 0.0
    %84 = vmatpush2.msra.mxu0 0.0
    %85 = vmatprep.subr.mxu0 0.0
    %86 = vmatpush2.msra.mxu0 0.0
    %87 = vmatprep.subr.mxu0 0.0
    %88 = vmatpush2.msra.mxu0 0.0
    %89 = vmatprep.subr.mxu0 0.0
    %90 = vmatpush2.msra.mxu0 0.0
    %91 = vmatprep.subr.mxu0 0.0
    %92 = vmatpush2.msra.mxu0 0.0
    %93 = vmatprep.subr.mxu0 0.0
    %94 = vmatpush2.msra.mxu0 0.0
    %95 = vmatprep.subr.mxu0 0.0
    %96 = vmatpush2.msra.mxu0 0.0
    %97 = vmatprep.subr.mxu0 0.0
    %98 = vmatpush2.msra.mxu0 0.0
    %99 = vmatprep.subr.mxu0 0.0
    %100 = vmatpush2.msra.mxu0 0.0
    %101 = vmatprep.subr.mxu0 0.0
    %102 = vmatpush2.msra.mxu0 0.0
    %103 = vmatprep.subr.mxu0 0.0
    %104 = vmatpush2.msra.mxu0 0.0
    %105 = vmatprep.subr.mxu0 0.0
    %106 = vmatpush2.msra.mxu0 0.0
    %107 = vmatprep.subr.mxu0 0.0
    %108 = vmatpush2.msra.mxu0 0.0
    %109 = vmatprep.subr.mxu0 0.0
    %110 = vmatpush2.msra.mxu0 0.0
    %111 = vmatprep.mubr.f32.mxu0 0.0
    %112 = vmatmul.mubr.f32.gmra.mxu0 %v45
    %v113 = vpop.f32.mrf.mxu0
    %v114 = vadd.f32 %v41, %v113
    %v115 = vpop.f32.mrf.mxu0
    %116 = vdwg.mxu0
    %v117 = vmax.f32 %v114, 0.0
    %v118 = vld [vmem:[%s3] sm:$0xff]
    %v119 = vld [vmem:[%s3 + $0x8] sm:$0xff]
    %v120 = vld [vmem:[%s3 + $0x10] sm:$0xff]
    %v121 = vld [vmem:[%s3 + $0x18] sm:$0xff]
    %v122 = vld [vmem:[%s3 + $0x20] sm:$0xff]
    %v123 = vld [vmem:[%s3 + $0x28] sm:$0xff]
    %v124 = vld [vmem:[%s3 + $0x30] sm:$0xff]
    %v125 = vld [vmem:[%s3 + $0x38] sm:$0xff]
    %v126 = vld [vmem:[%s3 + $0x40] sm:$0xff]
    %v127 = vld [vmem:[%s3 + $0x48] sm:$0xff]
    %v128 = vld [vmem:[%s3 + $0x50] sm:$0xff]
    %v129 = vld [vmem:[%s3 + $0x58] sm:$0xff]
    %v130 = vld [vmem:[%s3 + $0x60] sm:$0xff]
    %v131 = vld [vmem:[%s3 + $0x68] sm:$0xff]
    %v132 = vld [vmem:[%s3 + $0x70] sm:$0xff]
    %v133 = vld [vmem:[%s3 + $0x78] sm:$0xff]
    %v134 = vld [vmem:[%s4] sm:$0x1]
    %v136 = vlaneseq
    %v137 = vshrl.u32 %v136, 7
    %v138 = vsub.s32 0, %v137
    %v139 = vrot.slane %v134, %v138
    %141 = vmatprep.subr.mxu0 0.0
    %142 = vmatpush1.msra.mxu0 %v133
    %143 = vmatprep.subr.mxu0 0.0
    %144 = vmatpush1.msra.mxu0 %v132
    %145 = vmatprep.subr.mxu0 0.0
    %146 = vmatpush1.msra.mxu0 %v131
    %147 = vmatprep.subr.mxu0 0.0
    %148 = vmatpush1.msra.mxu0 %v130
    %149 = vmatprep.subr.mxu0 0.0
    %150 = vmatpush1.msra.mxu0 %v129
    %151 = vmatprep.subr.mxu0 0.0
    %152 = vmatpush1.msra.mxu0 %v128
    %153 = vmatprep.subr.mxu0 0.0
    %154 = vmatpush1.msra.mxu0 %v127
    %155 = vmatprep.subr.mxu0 0.0
    %156 = vmatpush1.msra.mxu0 %v126
    %157 = vmatprep.subr.mxu0 0.0
    %158 = vmatpush1.msra.mxu0 %v125
    %159 = vmatprep.subr.mxu0 0.0
    %160 = vmatpush1.msra.mxu0 %v124
    %161 = vmatprep.subr.mxu0 0.0
    %162 = vmatpush1.msra.mxu0 %v123
    %163 = vmatprep.subr.mxu0 0.0
    %164 = vmatpush1.msra.mxu0 %v122
    %165 = vmatprep.subr.mxu0 0.0
    %166 = vmatpush1.msra.mxu0 %v121
    %167 = vmatprep.subr.mxu0 0.0
    %168 = vmatpush1.msra.mxu0 %v120
    %169 = vmatprep.subr.mxu0 0.0
    %170 = vmatpush1.msra.mxu0 %v119
    %171 = vmatprep.subr.mxu0 0.0
    %172 = vmatpush1.msra.mxu0 %v118
    %173 = vmatprep.subr.mxu0 0.0
    %174 = vmatpush2.msra.mxu0 0.0
    %175 = vmatprep.subr.mxu0 0.0
    %176 = vmatpush2.msra.mxu0 0.0
    %177 = vmatprep.subr.mxu0 0.0
    %178 = vmatpush2.msra.mxu0 0.0
    %179 = vmatprep.subr.mxu0 0.0
    %180 = vmatpush2.msra.mxu0 0.0
    %181 = vmatprep.subr.mxu0 0.0
    %182 = vmatpush2.msra.mxu0 0.0
    %183 = vmatprep.subr.mxu0 0.0
    %184 = vmatpush2.msra.mxu0 0.0
    %185 = vmatprep.subr.mxu0 0.0
    %186 = vmatpush2.msra.mxu0 0.0
    %187 = vmatprep.subr.mxu0 0.0
    %188 = vmatpush2.msra.mxu0 0.0
    %189 = vmatprep.subr.mxu0 0.0
    %190 = vmatpush2.msra.mxu0 0.0
    %191 = vmatprep.subr.mxu0 0.0
    %192 = vmatpush2.msra.mxu0 0.0
    %193 = vmatprep.subr.mxu0 0.0
    %194 = vmatpush2.msra.mxu0 0.0
    %195 = vmatprep.subr.mxu0 0.0
    %196 = vmatpush2.msra.mxu0 0.0
    %197 = vmatprep.subr.mxu0 0.0
    %198 = vmatpush2.msra.mxu0 0.0
    %199 = vmatprep.subr.mxu0 0.0
    %200 = vmatpush2.msra.mxu0 0.0
    %201 = vmatprep.subr.mxu0 0.0
    %202 = vmatpush2.msra.mxu0 0.0
    %203 = vmatprep.subr.mxu0 0.0
    %204 = vmatpush2.msra.mxu0 0.0
    %205 = vmatprep.mubr.f32.mxu0 0.0
    %206 = vmatmul.mubr.f32.gmra.mxu0 %v117
    %v207 = vpop.f32.mrf.mxu0
    %v208 = vadd.f32 %v139, %v207
    %v209 = vpop.f32.mrf.mxu0
    %210 = vdwg.mxu0
    %v211 = vmax.f32 %v208, 0.0
    %v212 = vld [vmem:[%s5] sm:$0xff]
    %v213 = vld [vmem:[%s5 + $0x8] sm:$0xff]
    %v214 = vld [vmem:[%s5 + $0x10] sm:$0xff]
    %v215 = vld [vmem:[%s5 + $0x18] sm:$0xff]
    %v216 = vld [vmem:[%s5 + $0x20] sm:$0xff]
    %v217 = vld [vmem:[%s5 + $0x28] sm:$0xff]
    %v218 = vld [vmem:[%s5 + $0x30] sm:$0xff]
    %v219 = vld [vmem:[%s5 + $0x38] sm:$0xff]
    %v220 = vld [vmem:[%s6] sm:$0x1]
    %v222 = vlaneseq
    %v223 = vshrl.u32 %v222, 7
    %v224 = vsub.s32 0, %v223
    %v225 = vrot.slane %v220, %v224
    %v228 = vsel %vm43, %v211, 0
    %230 = vmatprep.subr.mxu0 0.0
    %231 = vmatpush1.msra.mxu0 0.0
    %232 = vmatprep.subr.mxu0 0.0
    %233 = vmatpush1.msra.mxu0 0.0
    %234 = vmatprep.subr.mxu0 0.0
    %235 = vmatpush1.msra.mxu0 0.0
    %236 = vmatprep.subr.mxu0 0.0
    %237 = vmatpush1.msra.mxu0 0.0
    %238 = vmatprep.subr.mxu0 0.0
    %239 = vmatpush1.msra.mxu0 0.0
    %240 = vmatprep.subr.mxu0 0.0
    %241 = vmatpush1.msra.mxu0 0.0
    %242 = vmatprep.subr.mxu0 0.0
    %243 = vmatpush1.msra.mxu0 0.0
    %244 = vmatprep.subr.mxu0 0.0
    %245 = vmatpush1.msra.mxu0 0.0
    %246 = vmatprep.subr.mxu0 0.0
    %247 = vmatpush1.msra.mxu0 %v219
    %248 = vmatprep.subr.mxu0 0.0
    %249 = vmatpush1.msra.mxu0 %v218
    %250 = vmatprep.subr.mxu0 0.0
    %251 = vmatpush1.msra.mxu0 %v217
    %252 = vmatprep.subr.mxu0 0.0
    %253 = vmatpush1.msra.mxu0 %v216
    %254 = vmatprep.subr.mxu0 0.0
    %255 = vmatpush1.msra.mxu0 %v215
    %256 = vmatprep.subr.mxu0 0.0
    %257 = vmatpush1.msra.mxu0 %v214
    %258 = vmatprep.subr.mxu0 0.0
    %259 = vmatpush1.msra.mxu0 %v213
    %260 = vmatprep.subr.mxu0 0.0
    %261 = vmatpush1.msra.mxu0 %v212
    %262 = vmatprep.subr.mxu0 0.0
    %263 = vmatpush2.msra.mxu0 0.0
    %264 = vmatprep.subr.mxu0 0.0
    %265 = vmatpush2.msra.mxu0 0.0
    %266 = vmatprep.subr.mxu0 0.0
    %267 = vmatpush2.msra.mxu0 0.0
    %268 = vmatprep.subr.mxu0 0.0
    %269 = vmatpush2.msra.mxu0 0.0
    %270 = vmatprep.subr.mxu0 0.0
    %271 = vmatpush2.msra.mxu0 0.0
    %272 = vmatprep.subr.mxu0 0.0
    %273 = vmatpush2.msra.mxu0 0.0
    %274 = vmatprep.subr.mxu0 0.0
    %275 = vmatpush2.msra.mxu0 0.0
    %276 = vmatprep.subr.mxu0 0.0
    %277 = vmatpush2.msra.mxu0 0.0
    %278 = vmatprep.subr.mxu0 0.0
    %279 = vmatpush2.msra.mxu0 0.0
    %280 = vmatprep.subr.mxu0 0.0
    %281 = vmatpush2.msra.mxu0 0.0
    %282 = vmatprep.subr.mxu0 0.0
    %283 = vmatpush2.msra.mxu0 0.0
    %284 = vmatprep.subr.mxu0 0.0
    %285 = vmatpush2.msra.mxu0 0.0
    %286 = vmatprep.subr.mxu0 0.0
    %287 = vmatpush2.msra.mxu0 0.0
    %288 = vmatprep.subr.mxu0 0.0
    %289 = vmatpush2.msra.mxu0 0.0
    %290 = vmatprep.subr.mxu0 0.0
    %291 = vmatpush2.msra.mxu0 0.0
    %292 = vmatprep.subr.mxu0 0.0
    %293 = vmatpush2.msra.mxu0 0.0
    %294 = vmatprep.mubr.f32.mxu0 0.0
    %295 = vmatmul.mubr.f32.gmra.mxu0 %v228
    %v296 = vpop.f32.mrf.mxu0
    %v297 = vadd.f32 %v225, %v296
    %v298 = vpop.f32.mrf.mxu0
    %299 = vdwg.mxu0
    %v300 = vxor.u32 %v297, 2147483648
    %v301 = vmul.f32 %v300, 1.442695
    %v302 = vpow.pop %v301
    %v303 = vadd.f32 %v302, 1.0
    %v304 = vrcp.pop %v303
    %v305 = vmul.f32 1.0, %v304
    %vm306 = vcmask 64512
    %307 = vst.msk [vmem:[#allocation2] sm:$0xff] %vm306, %v305
    // Predicated region
    $region30: #{diabetes_nn_forward.1} parent=1 // pred_check
      _
    $region31: #{diabetes_nn_forward.1} parent=1 // pred_check_branch
      %309 = sbr.rel (0) target = $region33
    $region32: #{diabetes_nn_forward.1} parent=1 // pred_region
      %s311 = ssub.s32 128, 16
      %312 = vsyncadd [#allocation3], %s311
      %s313 = sshll.u32 [#allocation2], 4
      %s314 = int_to_ptr.vmem [resolvable:$true] %s313
      %319 = dma.vmem_to_hbm [thread:$0]  %s314, 16, %s7, [#allocation3], 16, 16, 1
    $region33: #{diabetes_nn_forward.1} parent=1 // pred_fallthru
      _
    // Predicated region
    $region34: #{diabetes_nn_forward.1} parent=1 // pred_check
      _
    $region35: #{diabetes_nn_forward.1} parent=1 // pred_check_branch
      %321 = sbr.rel (0) target = $region37
    $region36: #{diabetes_nn_forward.1} parent=1 // pred_region
      %322 = dma.done [#allocation3], 128
    $region37: #{diabetes_nn_forward.1} parent=1 // pred_fallthru
      _
    %323 = vsyncpa [#allocation3], 1

</llo_original>
